<compile_context>
chip_gen: v7x
topology: tpu7x:2x2x1
jax: 0.10.0
libtpu: 0.0.40
codegen_flags: <defaults>
</compile_context>

<pallas_src>
import jax
import jax.numpy as jnp
from jax.experimental import pallas as pl
from jax.experimental.pallas import tpu as pltpu

ACTION_DIM = 1
OBS_DIM = 30
HIDDEN_SIZE = 100
BATCH_SIZE = 200

OBS_AUG = 32                     # [x(30) | a(1) | 1(1)] -> K = 32 (8,128)-friendly
A_COL = 30                       # column of x_aug holding the raw action
ONE_COL = 31                     # constant-1 column (carries the fused hidden bias)
HIDDEN_PAD = 128                 # head 1 in lanes [0,128), head 2 in [128,256)
FUSED_HIDDEN = 2 * HIDDEN_PAD    # 256
OUT_PAD = 128                    # lane-dense output slab; col 0 = q1, col 1 = q2
CORE_BLOCK_B = 112               # per-core batch block for the v7x two-core path


def critic_kernel(x_ref, wx_ref, wout_ref, bo_ref, out_ref):
    # Fused hidden layer for both heads (bias + la1 already folded into wx).
    h = jnp.tanh(jnp.dot(x_ref[...], wx_ref[...],
                         preferred_element_type=jnp.float32))      # [Bt, 256]
    # Fused output layer: col 0 = q1, col 1 = q2, rest zero padding.
    out_ref[...] = (jnp.dot(h, wout_ref[...],
                            preferred_element_type=jnp.float32)
                    + bo_ref[...])                                  # [Bt, 128]


def init_params(key):
    """Deterministic init mirroring the PyTorch __init__:
    weights ~ Normal(0, 0.1), biases ~ Uniform(0, 1)."""
    ks = jax.random.split(key, 12)

    def normal(k, shape):
        return (0.1 * jax.random.normal(k, shape)).astype(jnp.float32)

    def uniform(k, shape):
        return jax.random.uniform(k, shape, dtype=jnp.float32)

    return dict(
        la1_w=normal(ks[0], (OBS_DIM, ACTION_DIM)),      # torch Linear weight [out, in]
        la1_b=uniform(ks[1], (OBS_DIM,)),
        w1=normal(ks[2], (HIDDEN_SIZE, 2 * OBS_DIM)),
        b1=uniform(ks[3], (HIDDEN_SIZE,)),
        w2=normal(ks[4], (1, HIDDEN_SIZE)),
        b2=uniform(ks[5], (1,)),
        la2_w=normal(ks[6], (OBS_DIM, ACTION_DIM)),      # allocated but unused in forward()
        la2_b=uniform(ks[7], (OBS_DIM,)),
        w3=normal(ks[8], (HIDDEN_SIZE, 2 * OBS_DIM)),
        b3=uniform(ks[9], (HIDDEN_SIZE,)),
        w4=normal(ks[10], (1, HIDDEN_SIZE)),
        b4=uniform(ks[11], (1,)),
    )


def pack_params(params):
    """One-time (not per-call) parameter packing.

    Folds la1 and the fused hidden bias into the x-side weight:
      pre = x @ w_x + a * (la1_w @ w_a) + (b_h + la1_b @ w_a)
          = [x | a | 1] @ Wx
    Padded lanes stay exactly zero so padding never contaminates q1/q2.
    """
    f32 = jnp.float32
    la1_w = params["la1_w"][:, 0].astype(f32)            # [30]
    la1_b = params["la1_b"].astype(f32)                  # [30]

    w1T = params["w1"].T.astype(f32)                     # [60, 100]
    w3T = params["w3"].T.astype(f32)
    w1x, w1a = w1T[:OBS_DIM], w1T[OBS_DIM:]              # each [30, 100]
    w3x, w3a = w3T[:OBS_DIM], w3T[OBS_DIM:]

    wx = jnp.zeros((OBS_AUG, FUSED_HIDDEN), f32)
    # head 1 -> lanes [0, 100); head 2 -> lanes [128, 228)
    wx = wx.at[:OBS_DIM, :HIDDEN_SIZE].set(w1x)
    wx = wx.at[:OBS_DIM, HIDDEN_PAD:HIDDEN_PAD + HIDDEN_SIZE].set(w3x)
    wx = wx.at[A_COL, :HIDDEN_SIZE].set(la1_w @ w1a)
    wx = wx.at[A_COL, HIDDEN_PAD:HIDDEN_PAD + HIDDEN_SIZE].set(la1_w @ w3a)
    wx = wx.at[ONE_COL, :HIDDEN_SIZE].set(params["b1"].astype(f32) + la1_b @ w1a)
    wx = wx.at[ONE_COL, HIDDEN_PAD:HIDDEN_PAD + HIDDEN_SIZE].set(
        params["b3"].astype(f32) + la1_b @ w3a)

    wout = jnp.zeros((FUSED_HIDDEN, OUT_PAD), f32)
    wout = wout.at[:HIDDEN_SIZE, 0].set(params["w2"][0].astype(f32))
    wout = wout.at[HIDDEN_PAD:HIDDEN_PAD + HIDDEN_SIZE, 1].set(params["w4"][0].astype(f32))

    b_o = jnp.zeros((1, OUT_PAD), f32)
    b_o = b_o.at[0, 0].set(params["b2"][0].astype(f32))
    b_o = b_o.at[0, 1].set(params["b4"][0].astype(f32))
    return wx, wout, b_o


def _cost(b):
    flops = 2 * b * OBS_AUG * FUSED_HIDDEN + 2 * b * FUSED_HIDDEN * OUT_PAD
    bytes_accessed = 4 * (b * OBS_AUG + OBS_AUG * FUSED_HIDDEN
                          + FUSED_HIDDEN * OUT_PAD + OUT_PAD + b * OUT_PAD)
    return pl.CostEstimate(flops=flops, transcendentals=b * FUSED_HIDDEN,
                           bytes_accessed=bytes_accessed)


def _pallas_forward_gridless(x_aug, wx, wout, b_o):
    """Single-shot, whole-array VMEM blocks — right form for 1-TC chips (v5e/v6e)."""
    vmem = pl.BlockSpec(memory_space=pltpu.MemorySpace.VMEM)
    return pl.pallas_call(
        critic_kernel,
        out_shape=jax.ShapeDtypeStruct((BATCH_SIZE, OUT_PAD), jnp.float32),
        in_specs=[vmem, vmem, vmem, vmem],
        out_specs=vmem,
        cost_estimate=_cost(BATCH_SIZE),
    )(x_aug, wx, wout, b_o)


def _pallas_forward_two_core(x_aug, wx, wout, b_o):
    """v7x path: split the batch across both TensorCores with a parallel grid axis."""
    bpad = 2 * CORE_BLOCK_B                                   # 224 (8-aligned halves)
    xp = jnp.zeros((bpad, OBS_AUG), jnp.float32).at[:BATCH_SIZE].set(x_aug)
    out = pl.pallas_call(
        critic_kernel,
        out_shape=jax.ShapeDtypeStruct((bpad, OUT_PAD), jnp.float32),
        grid=(2,),
        in_specs=[
            pl.BlockSpec((CORE_BLOCK_B, OBS_AUG), lambda i: (i, 0)),
            pl.BlockSpec((OBS_AUG, FUSED_HIDDEN), lambda i: (0, 0)),
            pl.BlockSpec((FUSED_HIDDEN, OUT_PAD), lambda i: (0, 0)),
            pl.BlockSpec((1, OUT_PAD), lambda i: (0, 0)),
        ],
        out_specs=pl.BlockSpec((CORE_BLOCK_B, OUT_PAD), lambda i: (i, 0)),
        compiler_params=pltpu.CompilerParams(dimension_semantics=("parallel",)),
        cost_estimate=_cost(bpad),
    )(xp, wx, wout, b_o)
    return out[:BATCH_SIZE]


def _has_two_tensorcores():
    # v7x has 2 TensorCores per chip; v5e/v6e have 1 (keep gridless there).
    try:
        kind = jax.devices()[0].device_kind.lower()
    except Exception:
        return False
    return "v7" in kind


def make_critic_forward(params):
    """Build the forward fn. Packing happens ONCE here, not on every call."""
    assert ACTION_DIM == 1  # la1 fold relies on action_dim == 1
    wx, wout, b_o = pack_params(params)
    two_core = _has_two_tensorcores()

    @jax.jit
    def forward(x, a):
        x = x.reshape(BATCH_SIZE, -1).astype(jnp.float32)          # [B, 30]
        a = a.astype(jnp.float32)                                  # [B, 1]
        ones = jnp.ones((BATCH_SIZE, 1), jnp.float32)
        x_aug = jnp.concatenate([x, a, ones], axis=1)              # [B, 32]
        if two_core:
            out = _pallas_forward_two_core(x_aug, wx, wout, b_o)
        else:
            out = _pallas_forward_gridless(x_aug, wx, wout, b_o)
        return out[:, 0:1], out[:, 1:2]                            # q1, q2

    return forward


def critic_forward_ref(x, a, params):
    """Pure-JAX reference reproducing the PyTorch forward exactly."""
    x = x.reshape(BATCH_SIZE, -1)
    a1 = a @ params["la1_w"].T + params["la1_b"]
    xa1 = jnp.concatenate([x, a1], axis=1)
    q1 = jnp.tanh(xa1 @ params["w1"].T + params["b1"])
    q1 = q1 @ params["w2"].T + params["b2"]
    a2 = a @ params["la1_w"].T + params["la1_b"]   # forward() uses la1 twice
    xa2 = jnp.concatenate([x, a2], axis=1)
    q2 = jnp.tanh(xa2 @ params["w3"].T + params["b3"])
    q2 = q2 @ params["w4"].T + params["b4"]
    return q1, q2


if __name__ == "__main__":
    key = jax.random.PRNGKey(0)
    kp, kx, ka = jax.random.split(key, 3)

    params = init_params(kp)
    x = jax.random.normal(kx, (BATCH_SIZE, OBS_DIM), dtype=jnp.float32)
    a = jax.random.normal(ka, (BATCH_SIZE, ACTION_DIM), dtype=jnp.float32)

    critic_forward = make_critic_forward(params)   # packing hoisted out of per-call path
    q1, q2 = critic_forward(x, a)
    jax.block_until_ready((q1, q2))

    q1_ref, q2_ref = critic_forward_ref(x, a, params)
    assert q1.shape == (BATCH_SIZE, 1) and q2.shape == (BATCH_SIZE, 1)
    assert jnp.allclose(q1, q1_ref, atol=1e-4, rtol=1e-4)
    assert jnp.allclose(q2, q2_ref, atol=1e-4, rtol=1e-4)

    print("KERNEL_OK")
</pallas_src>

<mosaic_0001>
module attributes {stable_mosaic.version = 11 : i64} {
  func.func @critic_kernel(%arg0: memref<200x32xf32, #tpu.memory_space<vmem>>, %arg1: memref<32x256xf32, #tpu.memory_space<vmem>>, %arg2: memref<256x128xf32, #tpu.memory_space<vmem>>, %arg3: memref<1x128xf32, #tpu.memory_space<vmem>>, %arg4: memref<200x128xf32, #tpu.memory_space<vmem>>) attributes {dimension_semantics = [], scalar_prefetch = 0 : i64, scratch_operands = 0 : i64, tpu.core_type = #tpu.core_type<tc>} {
    %c0 = arith.constant 0 : index
    %c0_0 = arith.constant 0 : index
    %0 = vector.load %arg0[%c0, %c0_0] : memref<200x32xf32, #tpu.memory_space<vmem>>, vector<200x32xf32>
    %c0_1 = arith.constant 0 : index
    %c0_2 = arith.constant 0 : index
    %1 = vector.load %arg1[%c0_1, %c0_2] : memref<32x256xf32, #tpu.memory_space<vmem>>, vector<32x256xf32>
    %cst = arith.constant dense<0.000000e+00> : vector<200x256xf32>
    %2 = tpu.matmul %0, %1, %cst {dimension_numbers = #tpu.dot_dimension_numbers<[1], [0], [0], [1], [0, 0, 1, 1], [], []>} : vector<200x32xf32>, vector<32x256xf32>, vector<200x256xf32> -> vector<200x256xf32>
    %3 = math.tanh %2 : vector<200x256xf32>
    %c0_3 = arith.constant 0 : index
    %c0_4 = arith.constant 0 : index
    %4 = vector.load %arg2[%c0_3, %c0_4] : memref<256x128xf32, #tpu.memory_space<vmem>>, vector<256x128xf32>
    %cst_5 = arith.constant dense<0.000000e+00> : vector<200x128xf32>
    %5 = tpu.matmul %3, %4, %cst_5 {dimension_numbers = #tpu.dot_dimension_numbers<[1], [0], [0], [1], [0, 0, 1, 1], [], []>} : vector<200x256xf32>, vector<256x128xf32>, vector<200x128xf32> -> vector<200x128xf32>
    %c0_6 = arith.constant 0 : index
    %c0_7 = arith.constant 0 : index
    %6 = vector.load %arg3[%c0_6, %c0_7] : memref<1x128xf32, #tpu.memory_space<vmem>>, vector<1x128xf32>
    %7 = vector.broadcast %6 : vector<1x128xf32> to vector<200x128xf32>
    %8 = arith.addf %5, %7 : vector<200x128xf32>
    %c0_8 = arith.constant 0 : index
    %c0_9 = arith.constant 0 : index
    %9 = vector.load %arg4[%c0_8, %c0_9] : memref<200x128xf32, #tpu.memory_space<vmem>>, vector<200x128xf32>
    tpu.vector_store %arg4[%c0_8, %c0_9], %8 {strides = array<i32>} : memref<200x128xf32, #tpu.memory_space<vmem>>, vector<200x128xf32>,
    return
  }
}

</mosaic_0001>

<llo_original>
// kernel: forward.1
$region0: #{forward.1}
  #allocation0 [shape = 'u32[]', space=smem, size = 0x4, offset = 0x4, fixed_abs, tag = 'smem constant byte address 0x4 - core index']
  #allocation1 [shape = 'u32[144,128]{1,0:T(1,128)}', space=vmem, size = 0x12000, scoped, tag = 'internal scratch']
  %s0 = inlined_call_operand.vmem [shape: f32[200,32], index: 0, kind: input, shape index: {}]
  %s1 = inlined_call_operand.vmem [shape: f32[32,256], index: 1, kind: input, shape index: {}]
  %s2 = inlined_call_operand.vmem [shape: f32[256,128], index: 2, kind: input, shape index: {}]
  %s3 = inlined_call_operand.vmem [shape: f32[1,128], index: 3, kind: input, shape index: {}]
  %s4 = inlined_call_operand.vmem [shape: f32[200,128], index: 4, kind: output, shape index: {}]
  %s5 = sld [smem:[#allocation0]]
  $region26: #{forward.1} parent=0
    _
  %s7 = ssub.s32 1, %s5
  %s8 = scalar_select 0, %s7, %s5
  // Predicated region
  $region2: #{forward.1} parent=0 // pred_check
    _
  $region3: #{forward.1} parent=0 // pred_check_branch
    %10 = sbr.rel (0) target = $region5
  $region4: #{forward.1} parent=0 // pred_region
    _
  $region5: #{forward.1} parent=0 // pred_fallthru
    _
  // Predicated region
  $region6: #{forward.1} parent=0 // pred_check
    _
  $region7: #{forward.1} parent=0 // pred_check_branch
    %12 = sbr.rel (0) target = $region9
  $region8: #{forward.1} parent=0 // pred_region
    _
  $region9: #{forward.1} parent=0 // pred_fallthru
    _
  // Predicated region
  $region10: #{forward.1} parent=0 // pred_check
    _
  $region11: #{forward.1} parent=0 // pred_check_branch
    %14 = sbr.rel (0) target = $region13
  $region12: #{forward.1} parent=0 // pred_region
    _
  $region13: #{forward.1} parent=0 // pred_fallthru
    _
  // Predicated region
  $region14: #{forward.1} parent=0 // pred_check
    _
  $region15: #{forward.1} parent=0 // pred_check_branch
    %16 = sbr.rel (0) target = $region17
  $region16: #{forward.1} parent=0 // pred_region
    _
  $region17: #{forward.1} parent=0 // pred_fallthru
    _
  %v17 = vld [vmem:[%s0] sm:$0xff]
  %v18 = vld [vmem:[%s0 + $0x8] sm:$0xff]
  %v19 = vld [vmem:[%s0 + $0x10] sm:$0xff]
  %v20 = vld [vmem:[%s0 + $0x18] sm:$0xff]
  %v21 = vld [vmem:[%s0 + $0x20] sm:$0xff]
  %v22 = vld [vmem:[%s0 + $0x28] sm:$0xff]
  %v23 = vld [vmem:[%s0 + $0x30] sm:$0xff]
  %v24 = vld [vmem:[%s0 + $0x38] sm:$0xff]
  %v25 = vld [vmem:[%s0 + $0x40] sm:$0xff]
  %v26 = vld [vmem:[%s0 + $0x48] sm:$0xff]
  %v27 = vld [vmem:[%s0 + $0x50] sm:$0xff]
  %v28 = vld [vmem:[%s0 + $0x58] sm:$0xff]
  %v29 = vld [vmem:[%s0 + $0x60] sm:$0xff]
  %v30 = vld [vmem:[%s0 + $0x68] sm:$0xff]
  %v31 = vld [vmem:[%s0 + $0x70] sm:$0xff]
  %v32 = vld [vmem:[%s0 + $0x78] sm:$0xff]
  %v33 = vld [vmem:[%s0 + $0x80] sm:$0xff]
  %v34 = vld [vmem:[%s0 + $0x88] sm:$0xff]
  %v35 = vld [vmem:[%s0 + $0x90] sm:$0xff]
  %v36 = vld [vmem:[%s0 + $0x98] sm:$0xff]
  %v37 = vld [vmem:[%s0 + $0xa0] sm:$0xff]
  %v38 = vld [vmem:[%s0 + $0xa8] sm:$0xff]
  %v39 = vld [vmem:[%s0 + $0xb0] sm:$0xff]
  %v40 = vld [vmem:[%s0 + $0xb8] sm:$0xff]
  %v41 = vld [vmem:[%s0 + $0xc0] sm:$0xff]
  %v42 = vld [vmem:[%s1] sm:$0xff]
  %v43 = vld [vmem:[%s1 + $0x8] sm:$0xff]
  %v44 = vld [vmem:[%s1 + $0x10] sm:$0xff]
  %v45 = vld [vmem:[%s1 + $0x18] sm:$0xff]
  %v46 = vld [vmem:[%s1 + $0x20] sm:$0xff]
  %v47 = vld [vmem:[%s1 + $0x28] sm:$0xff]
  %v48 = vld [vmem:[%s1 + $0x30] sm:$0xff]
  %v49 = vld [vmem:[%s1 + $0x38] sm:$0xff]
  %vm50 = vcmask 261120
  %v52 = vsel %vm50, %v17, 0
  %v55 = vsel %vm50, %v18, 0
  %v58 = vsel %vm50, %v19, 0
  %v61 = vsel %vm50, %v20, 0
  %v64 = vsel %vm50, %v21, 0
  %v67 = vsel %vm50, %v22, 0
  %v70 = vsel %vm50, %v23, 0
  %v73 = vsel %vm50, %v24, 0
  %v76 = vsel %vm50, %v25, 0
  %v79 = vsel %vm50, %v26, 0
  %v82 = vsel %vm50, %v27, 0
  %v85 = vsel %vm50, %v28, 0
  %v88 = vsel %vm50, %v29, 0
  %v91 = vsel %vm50, %v30, 0
  %v94 = vsel %vm50, %v31, 0
  %v97 = vsel %vm50, %v32, 0
  %v100 = vsel %vm50, %v33, 0
  %v103 = vsel %vm50, %v34, 0
  %v106 = vsel %vm50, %v35, 0
  %v109 = vsel %vm50, %v36, 0
  %v112 = vsel %vm50, %v37, 0
  %v115 = vsel %vm50, %v38, 0
  %v118 = vsel %vm50, %v39, 0
  %v121 = vsel %vm50, %v40, 0
  %v124 = vsel %vm50, %v41, 0
  %126 = vmatprep.subr.mxu0 %v43
  %127 = vmatpush1.msra.mxu0 %v42
  %128 = vmatprep.subr.mxu0 %v45
  %129 = vmatpush1.msra.mxu0 %v44
  %130 = vmatprep.subr.mxu0 %v47
  %131 = vmatpush1.msra.mxu0 %v46
  %132 = vmatprep.subr.mxu0 %v49
  %133 = vmatpush1.msra.mxu0 %v48
  %134 = vmatprep.subr.mxu0 0.0
  %135 = vmatpush1.msra.mxu0 0.0
  %136 = vmatprep.subr.mxu0 0.0
  %137 = vmatpush1.msra.mxu0 0.0
  %138 = vmatprep.subr.mxu0 0.0
  %139 = vmatpush1.msra.mxu0 0.0
  %140 = vmatprep.subr.mxu0 0.0
  %141 = vmatpush1.msra.mxu0 0.0
  %142 = vmatprep.subr.mxu0 0.0
  %143 = vmatpush1.msra.mxu0 0.0
  %144 = vmatprep.subr.mxu0 0.0
  %145 = vmatpush1.msra.mxu0 0.0
  %146 = vmatprep.subr.mxu0 0.0
  %147 = vmatpush1.msra.mxu0 0.0
  %148 = vmatprep.subr.mxu0 0.0
  %149 = vmatpush1.msra.mxu0 0.0
  %150 = vmatprep.subr.mxu0 0.0
  %151 = vmatpush1.msra.mxu0 0.0
  %152 = vmatprep.subr.mxu0 0.0
  %153 = vmatpush1.msra.mxu0 0.0
  %154 = vmatprep.subr.mxu0 0.0
  %155 = vmatpush1.msra.mxu0 0.0
  %156 = vmatprep.subr.mxu0 0.0
  %157 = vmatpush1.msra.mxu0 0.0
  %158 = vmatprep.subr.mxu0 0.0
  %159 = vmatpush1.msra.mxu0 0.0
  %160 = vmatprep.subr.mxu0 0.0
  %161 = vmatpush1.msra.mxu0 0.0
  %162 = vmatprep.subr.mxu0 0.0
  %163 = vmatpush1.msra.mxu0 0.0
  %164 = vmatprep.subr.mxu0 0.0
  %165 = vmatpush1.msra.mxu0 0.0
  %166 = vmatprep.subr.mxu0 0.0
  %167 = vmatpush1.msra.mxu0 0.0
  %168 = vmatprep.subr.mxu0 0.0
  %169 = vmatpush1.msra.mxu0 0.0
  %170 = vmatprep.subr.mxu0 0.0
  %171 = vmatpush1.msra.mxu0 0.0
  %172 = vmatprep.subr.mxu0 0.0
  %173 = vmatpush1.msra.mxu0 0.0
  %174 = vmatprep.subr.mxu0 0.0
  %175 = vmatpush1.msra.mxu0 0.0
  %176 = vmatprep.subr.mxu0 0.0
  %177 = vmatpush1.msra.mxu0 0.0
  %178 = vmatprep.subr.mxu0 0.0
  %179 = vmatpush1.msra.mxu0 0.0
  %180 = vmatprep.subr.mxu0 0.0
  %181 = vmatpush1.msra.mxu0 0.0
  %182 = vmatprep.subr.mxu0 0.0
  %183 = vmatpush1.msra.mxu0 0.0
  %184 = vmatprep.subr.mxu0 0.0
  %185 = vmatpush1.msra.mxu0 0.0
  %186 = vmatprep.subr.mxu0 0.0
  %187 = vmatpush1.msra.mxu0 0.0
  %188 = vmatprep.subr.mxu0 0.0
  %189 = vmatpush1.msra.mxu0 0.0
  %190 = vmatprep.mubr.f32.mxu0 0.0
  %191 = vmatmul.mubr.f32.gmra.mrb[0].mxu0 %v52
  %v192 = vpop.f32.mrb[0].mxu0
  %v193 = vadd.f32 0.0, %v192
  %v194 = vpop.f32.mrb[0].mxu0
  %v195 = vadd.f32 0.0, %v194
  %196 = vmatprep.mubr.f32.mxu0 0.0
  %197 = vmatmul.mubr.f32.gmra.mrb[0].mxu0 %v55
  %v198 = vpop.f32.mrb[0].mxu0
  %v199 = vadd.f32 0.0, %v198
  %v200 = vpop.f32.mrb[0].mxu0
  %v201 = vadd.f32 0.0, %v200
  %202 = vmatprep.mubr.f32.mxu0 0.0
  %203 = vmatmul.mubr.f32.gmra.mrb[0].mxu0 %v58
  %v204 = vpop.f32.mrb[0].mxu0
  %v205 = vadd.f32 0.0, %v204
  %v206 = vpop.f32.mrb[0].mxu0
  %v207 = vadd.f32 0.0, %v206
  %208 = vmatprep.mubr.f32.mxu0 0.0
  %209 = vmatmul.mubr.f32.gmra.mrb[0].mxu0 %v61
  %v210 = vpop.f32.mrb[0].mxu0
  %v211 = vadd.f32 0.0, %v210
  %v212 = vpop.f32.mrb[0].mxu0
  %v213 = vadd.f32 0.0, %v212
  %214 = vmatprep.mubr.f32.mxu0 0.0
  %215 = vmatmul.mubr.f32.gmra.mrb[0].mxu0 %v64
  %v216 = vpop.f32.mrb[0].mxu0
  %v217 = vadd.f32 0.0, %v216
  %v218 = vpop.f32.mrb[0].mxu0
  %v219 = vadd.f32 0.0, %v218
  %220 = vmatprep.mubr.f32.mxu0 0.0
  %221 = vmatmul.mubr.f32.gmra.mrb[0].mxu0 %v67
  %v222 = vpop.f32.mrb[0].mxu0
  %v223 = vadd.f32 0.0, %v222
  %v224 = vpop.f32.mrb[0].mxu0
  %v225 = vadd.f32 0.0, %v224
  %226 = vmatprep.mubr.f32.mxu0 0.0
  %227 = vmatmul.mubr.f32.gmra.mrb[0].mxu0 %v70
  %v228 = vpop.f32.mrb[0].mxu0
  %v229 = vadd.f32 0.0, %v228
  %v230 = vpop.f32.mrb[0].mxu0
  %v231 = vadd.f32 0.0, %v230
  %232 = vmatprep.mubr.f32.mxu0 0.0
  %233 = vmatmul.mubr.f32.gmra.mrb[0].mxu0 %v73
  %v234 = vpop.f32.mrb[0].mxu0
  %v235 = vadd.f32 0.0, %v234
  %v236 = vpop.f32.mrb[0].mxu0
  %v237 = vadd.f32 0.0, %v236
  %238 = vmatprep.mubr.f32.mxu0 0.0
  %239 = vmatmul.mubr.f32.gmra.mrb[0].mxu0 %v76
  %v240 = vpop.f32.mrb[0].mxu0
  %v241 = vadd.f32 0.0, %v240
  %v242 = vpop.f32.mrb[0].mxu0
  %v243 = vadd.f32 0.0, %v242
  %244 = vmatprep.mubr.f32.mxu0 0.0
  %245 = vmatmul.mubr.f32.gmra.mrb[0].mxu0 %v79
  %v246 = vpop.f32.mrb[0].mxu0
  %v247 = vadd.f32 0.0, %v246
  %v248 = vpop.f32.mrb[0].mxu0
  %v249 = vadd.f32 0.0, %v248
  %250 = vmatprep.mubr.f32.mxu0 0.0
  %251 = vmatmul.mubr.f32.gmra.mrb[0].mxu0 %v82
  %v252 = vpop.f32.mrb[0].mxu0
  %v253 = vadd.f32 0.0, %v252
  %v254 = vpop.f32.mrb[0].mxu0
  %v255 = vadd.f32 0.0, %v254
  %256 = vmatprep.mubr.f32.mxu0 0.0
  %257 = vmatmul.mubr.f32.gmra.mrb[0].mxu0 %v85
  %v258 = vpop.f32.mrb[0].mxu0
  %v259 = vadd.f32 0.0, %v258
  %v260 = vpop.f32.mrb[0].mxu0
  %v261 = vadd.f32 0.0, %v260
  %262 = vmatprep.mubr.f32.mxu0 0.0
  %263 = vmatmul.mubr.f32.gmra.mrb[0].mxu0 %v88
  %v264 = vpop.f32.mrb[0].mxu0
  %v265 = vadd.f32 0.0, %v264
  %v266 = vpop.f32.mrb[0].mxu0
  %v267 = vadd.f32 0.0, %v266
  %268 = vmatprep.mubr.f32.mxu0 0.0
  %269 = vmatmul.mubr.f32.gmra.mrb[0].mxu0 %v91
  %v270 = vpop.f32.mrb[0].mxu0
  %v271 = vadd.f32 0.0, %v270
  %v272 = vpop.f32.mrb[0].mxu0
  %v273 = vadd.f32 0.0, %v272
  %274 = vmatprep.mubr.f32.mxu0 0.0
  %275 = vmatmul.mubr.f32.gmra.mrb[0].mxu0 %v94
  %v276 = vpop.f32.mrb[0].mxu0
  %v277 = vadd.f32 0.0, %v276
  %v278 = vpop.f32.mrb[0].mxu0
  %v279 = vadd.f32 0.0, %v278
  %280 = vmatprep.mubr.f32.mxu0 0.0
  %281 = vmatmul.mubr.f32.gmra.mrb[0].mxu0 %v97
  %v282 = vpop.f32.mrb[0].mxu0
  %v283 = vadd.f32 0.0, %v282
  %v284 = vpop.f32.mrb[0].mxu0
  %v285 = vadd.f32 0.0, %v284
  %286 = vmatprep.mubr.f32.mxu0 0.0
  %287 = vmatmul.mubr.f32.gmra.mrb[0].mxu0 %v100
  %v288 = vpop.f32.mrb[0].mxu0
  %v289 = vadd.f32 0.0, %v288
  %v290 = vpop.f32.mrb[0].mxu0
  %v291 = vadd.f32 0.0, %v290
  %292 = vmatprep.mubr.f32.mxu0 0.0
  %293 = vmatmul.mubr.f32.gmra.mrb[0].mxu0 %v103
  %v294 = vpop.f32.mrb[0].mxu0
  %v295 = vadd.f32 0.0, %v294
  %v296 = vpop.f32.mrb[0].mxu0
  %v297 = vadd.f32 0.0, %v296
  %298 = vmatprep.mubr.f32.mxu0 0.0
  %299 = vmatmul.mubr.f32.gmra.mrb[0].mxu0 %v106
  %v300 = vpop.f32.mrb[0].mxu0
  %v301 = vadd.f32 0.0, %v300
  %v302 = vpop.f32.mrb[0].mxu0
  %v303 = vadd.f32 0.0, %v302
  %304 = vmatprep.mubr.f32.mxu0 0.0
  %305 = vmatmul.mubr.f32.gmra.mrb[0].mxu0 %v109
  %v306 = vpop.f32.mrb[0].mxu0
  %v307 = vadd.f32 0.0, %v306
  %v308 = vpop.f32.mrb[0].mxu0
  %v309 = vadd.f32 0.0, %v308
  %310 = vmatprep.mubr.f32.mxu0 0.0
  %311 = vmatmul.mubr.f32.gmra.mrb[0].mxu0 %v112
  %v312 = vpop.f32.mrb[0].mxu0
  %v313 = vadd.f32 0.0, %v312
  %v314 = vpop.f32.mrb[0].mxu0
  %v315 = vadd.f32 0.0, %v314
  %316 = vmatprep.mubr.f32.mxu0 0.0
  %317 = vmatmul.mubr.f32.gmra.mrb[0].mxu0 %v115
  %v318 = vpop.f32.mrb[0].mxu0
  %v319 = vadd.f32 0.0, %v318
  %v320 = vpop.f32.mrb[0].mxu0
  %v321 = vadd.f32 0.0, %v320
  %322 = vmatprep.mubr.f32.mxu0 0.0
  %323 = vmatmul.mubr.f32.gmra.mrb[0].mxu0 %v118
  %v324 = vpop.f32.mrb[0].mxu0
  %v325 = vadd.f32 0.0, %v324
  %v326 = vpop.f32.mrb[0].mxu0
  %v327 = vadd.f32 0.0, %v326
  %328 = vmatprep.mubr.f32.mxu0 0.0
  %329 = vmatmul.mubr.f32.gmra.mrb[0].mxu0 %v121
  %v330 = vpop.f32.mrb[0].mxu0
  %v331 = vadd.f32 0.0, %v330
  %v332 = vpop.f32.mrb[0].mxu0
  %v333 = vadd.f32 0.0, %v332
  %334 = vmatprep.mubr.f32.mxu0 0.0
  %335 = vmatmul.mubr.f32.gmra.mrb[0].mxu0 %v124
  %v336 = vpop.f32.mrb[0].mxu0
  %v337 = vadd.f32 0.0, %v336
  %v338 = vpop.f32.mrb[0].mxu0
  %v339 = vadd.f32 0.0, %v338
  %340 = vdwg.mxu0
  %v341 = vtanh.pop %v193
  %v342 = vtanh.pop %v195
  %v343 = vtanh.pop %v199
  %v344 = vtanh.pop %v201
  %v345 = vtanh.pop %v205
  %v346 = vtanh.pop %v207
  %v347 = vtanh.pop %v211
  %v348 = vtanh.pop %v213
  %v349 = vtanh.pop %v217
  %v350 = vtanh.pop %v219
  %v351 = vtanh.pop %v223
  %v352 = vtanh.pop %v225
  %v353 = vtanh.pop %v229
  %v354 = vtanh.pop %v231
  %v355 = vtanh.pop %v235
  %v356 = vtanh.pop %v237
  %v357 = vtanh.pop %v241
  %v358 = vtanh.pop %v243
  %v359 = vtanh.pop %v247
  %v360 = vtanh.pop %v249
  %v361 = vtanh.pop %v253
  %v362 = vtanh.pop %v255
  %v363 = vtanh.pop %v259
  %v364 = vtanh.pop %v261
  %v365 = vtanh.pop %v265
  %v366 = vtanh.pop %v267
  %v367 = vtanh.pop %v271
  %v368 = vtanh.pop %v273
  %v369 = vtanh.pop %v277
  %v370 = vtanh.pop %v279
  %v371 = vtanh.pop %v283
  %v372 = vtanh.pop %v285
  %v373 = vtanh.pop %v289
  %v374 = vtanh.pop %v291
  %v375 = vtanh.pop %v295
  %v376 = vtanh.pop %v297
  %v377 = vtanh.pop %v301
  %v378 = vtanh.pop %v303
  %v379 = vtanh.pop %v307
  %v380 = vtanh.pop %v309
  %v381 = vtanh.pop %v313
  %v382 = vtanh.pop %v315
  %v383 = vtanh.pop %v319
  %v384 = vtanh.pop %v321
  %v385 = vtanh.pop %v325
  %v386 = vtanh.pop %v327
  %v387 = vtanh.pop %v331
  %v388 = vtanh.pop %v333
  %v389 = vtanh.pop %v337
  %v390 = vtanh.pop %v339
  %v391 = vld [vmem:[%s2] sm:$0xff]
  %v392 = vld [vmem:[%s2 + $0x8] sm:$0xff]
  %v393 = vld [vmem:[%s2 + $0x10] sm:$0xff]
  %v394 = vld [vmem:[%s2 + $0x18] sm:$0xff]
  %v395 = vld [vmem:[%s2 + $0x20] sm:$0xff]
  %v396 = vld [vmem:[%s2 + $0x28] sm:$0xff]
  %v397 = vld [vmem:[%s2 + $0x30] sm:$0xff]
  %v398 = vld [vmem:[%s2 + $0x38] sm:$0xff]
  %v399 = vld [vmem:[%s2 + $0x40] sm:$0xff]
  %v400 = vld [vmem:[%s2 + $0x48] sm:$0xff]
  %v401 = vld [vmem:[%s2 + $0x50] sm:$0xff]
  %v402 = vld [vmem:[%s2 + $0x58] sm:$0xff]
  %v403 = vld [vmem:[%s2 + $0x60] sm:$0xff]
  %v404 = vld [vmem:[%s2 + $0x68] sm:$0xff]
  %v405 = vld [vmem:[%s2 + $0x70] sm:$0xff]
  %v406 = vld [vmem:[%s2 + $0x78] sm:$0xff]
  %v407 = vld [vmem:[%s2 + $0x80] sm:$0xff]
  %v408 = vld [vmem:[%s2 + $0x88] sm:$0xff]
  %v409 = vld [vmem:[%s2 + $0x90] sm:$0xff]
  %v410 = vld [vmem:[%s2 + $0x98] sm:$0xff]
  %v411 = vld [vmem:[%s2 + $0xa0] sm:$0xff]
  %v412 = vld [vmem:[%s2 + $0xa8] sm:$0xff]
  %v413 = vld [vmem:[%s2 + $0xb0] sm:$0xff]
  %v414 = vld [vmem:[%s2 + $0xb8] sm:$0xff]
  %v415 = vld [vmem:[%s2 + $0xc0] sm:$0xff]
  %v416 = vld [vmem:[%s2 + $0xc8] sm:$0xff]
  %v417 = vld [vmem:[%s2 + $0xd0] sm:$0xff]
  %v418 = vld [vmem:[%s2 + $0xd8] sm:$0xff]
  %v419 = vld [vmem:[%s2 + $0xe0] sm:$0xff]
  %v420 = vld [vmem:[%s2 + $0xe8] sm:$0xff]
  %v421 = vld [vmem:[%s2 + $0xf0] sm:$0xff]
  %v422 = vld [vmem:[%s2 + $0xf8] sm:$0xff]
  %v423 = vld [vmem:[%s3] sm:$0x1]
  %v425 = vlaneseq
  %v426 = vshrl.u32 %v425, 7
  %v427 = vsub.s32 0, %v426
  %v428 = vrot.slane %v423, %v427
  %430 = vmatprep.subr.mxu0 0.0
  %431 = vmatpush1.msra.mxu0 %v391
  %432 = vmatprep.subr.mxu0 0.0
  %433 = vmatpush1.msra.mxu0 %v392
  %434 = vmatprep.subr.mxu0 0.0
  %435 = vmatpush1.msra.mxu0 %v393
  %436 = vmatprep.subr.mxu0 0.0
  %437 = vmatpush1.msra.mxu0 %v394
  %438 = vmatprep.subr.mxu0 0.0
  %439 = vmatpush1.msra.mxu0 %v395
  %440 = vmatprep.subr.mxu0 0.0
  %441 = vmatpush1.msra.mxu0 %v396
  %442 = vmatprep.subr.mxu0 0.0
  %443 = vmatpush1.msra.mxu0 %v397
  %444 = vmatprep.subr.mxu0 0.0
  %445 = vmatpush1.msra.mxu0 %v398
  %446 = vmatprep.subr.mxu0 0.0
  %447 = vmatpush1.msra.mxu0 %v399
  %448 = vmatprep.subr.mxu0 0.0
  %449 = vmatpush1.msra.mxu0 %v400
  %450 = vmatprep.subr.mxu0 0.0
  %451 = vmatpush1.msra.mxu0 %v401
  %452 = vmatprep.subr.mxu0 0.0
  %453 = vmatpush1.msra.mxu0 %v402
  %454 = vmatprep.subr.mxu0 0.0
  %455 = vmatpush1.msra.mxu0 %v403
  %456 = vmatprep.subr.mxu0 0.0
  %457 = vmatpush1.msra.mxu0 %v404
  %458 = vmatprep.subr.mxu0 0.0
  %459 = vmatpush1.msra.mxu0 %v405
  %460 = vmatprep.subr.mxu0 0.0
  %461 = vmatpush1.msra.mxu0 %v406
  %462 = vmatprep.subr.mxu0 0.0
  %463 = vmatpush1.msra.mxu0 %v407
  %464 = vmatprep.subr.mxu0 0.0
  %465 = vmatpush1.msra.mxu0 %v408
  %466 = vmatprep.subr.mxu0 0.0
  %467 = vmatpush1.msra.mxu0 %v409
  %468 = vmatprep.subr.mxu0 0.0
  %469 = vmatpush1.msra.mxu0 %v410
  %470 = vmatprep.subr.mxu0 0.0
  %471 = vmatpush1.msra.mxu0 %v411
  %472 = vmatprep.subr.mxu0 0.0
  %473 = vmatpush1.msra.mxu0 %v412
  %474 = vmatprep.subr.mxu0 0.0
  %475 = vmatpush1.msra.mxu0 %v413
  %476 = vmatprep.subr.mxu0 0.0
  %477 = vmatpush1.msra.mxu0 %v414
  %478 = vmatprep.subr.mxu0 0.0
  %479 = vmatpush1.msra.mxu0 %v415
  %480 = vmatprep.subr.mxu0 0.0
  %481 = vmatpush1.msra.mxu0 %v416
  %482 = vmatprep.subr.mxu0 0.0
  %483 = vmatpush1.msra.mxu0 %v417
  %484 = vmatprep.subr.mxu0 0.0
  %485 = vmatpush1.msra.mxu0 %v418
  %486 = vmatprep.subr.mxu0 0.0
  %487 = vmatpush1.msra.mxu0 %v419
  %488 = vmatprep.subr.mxu0 0.0
  %489 = vmatpush1.msra.mxu0 %v420
  %490 = vmatprep.subr.mxu0 0.0
  %491 = vmatpush1.msra.mxu0 %v421
  %492 = vmatprep.subr.mxu0 0.0
  %493 = vmatpush1.msra.mxu0 %v422
  %494 = vmatprep.mubr.f32.mxu0 %v342
  %495 = vmatmul.mubr.f32.gmra.mrb[0].mxu0 %v341
  %v496 = vpop.f32.mrb[0].mxu0
  %v497 = vadd.f32 %v428, %v496
  %v498 = vpop.f32.mrb[0].mxu0
  %499 = vmatprep.mubr.f32.mxu0 %v344
  %500 = vmatmul.mubr.f32.gmra.mrb[0].mxu0 %v343
  %v501 = vpop.f32.mrb[0].mxu0
  %v502 = vadd.f32 %v428, %v501
  %v503 = vpop.f32.mrb[0].mxu0
  %504 = vmatprep.mubr.f32.mxu0 %v346
  %505 = vmatmul.mubr.f32.gmra.mrb[0].mxu0 %v345
  %v506 = vpop.f32.mrb[0].mxu0
  %v507 = vadd.f32 %v428, %v506
  %v508 = vpop.f32.mrb[0].mxu0
  %509 = vmatprep.mubr.f32.mxu0 %v348
  %510 = vmatmul.mubr.f32.gmra.mrb[0].mxu0 %v347
  %v511 = vpop.f32.mrb[0].mxu0
  %v512 = vadd.f32 %v428, %v511
  %v513 = vpop.f32.mrb[0].mxu0
  %514 = vmatprep.mubr.f32.mxu0 %v350
  %515 = vmatmul.mubr.f32.gmra.mrb[0].mxu0 %v349
  %v516 = vpop.f32.mrb[0].mxu0
  %v517 = vadd.f32 %v428, %v516
  %v518 = vpop.f32.mrb[0].mxu0
  %519 = vmatprep.mubr.f32.mxu0 %v352
  %520 = vmatmul.mubr.f32.gmra.mrb[0].mxu0 %v351
  %v521 = vpop.f32.mrb[0].mxu0
  %v522 = vadd.f32 %v428, %v521
  %v523 = vpop.f32.mrb[0].mxu0
  %524 = vmatprep.mubr.f32.mxu0 %v354
  %525 = vmatmul.mubr.f32.gmra.mrb[0].mxu0 %v353
  %v526 = vpop.f32.mrb[0].mxu0
  %v527 = vadd.f32 %v428, %v526
  %v528 = vpop.f32.mrb[0].mxu0
  %529 = vmatprep.mubr.f32.mxu0 %v356
  %530 = vmatmul.mubr.f32.gmra.mrb[0].mxu0 %v355
  %v531 = vpop.f32.mrb[0].mxu0
  %v532 = vadd.f32 %v428, %v531
  %v533 = vpop.f32.mrb[0].mxu0
  %534 = vmatprep.mubr.f32.mxu0 %v358
  %535 = vmatmul.mubr.f32.gmra.mrb[0].mxu0 %v357
  %v536 = vpop.f32.mrb[0].mxu0
  %v537 = vadd.f32 %v428, %v536
  %v538 = vpop.f32.mrb[0].mxu0
  %539 = vmatprep.mubr.f32.mxu0 %v360
  %540 = vmatmul.mubr.f32.gmra.mrb[0].mxu0 %v359
  %v541 = vpop.f32.mrb[0].mxu0
  %v542 = vadd.f32 %v428, %v541
  %v543 = vpop.f32.mrb[0].mxu0
  %544 = vmatprep.mubr.f32.mxu0 %v362
  %545 = vmatmul.mubr.f32.gmra.mrb[0].mxu0 %v361
  %v546 = vpop.f32.mrb[0].mxu0
  %v547 = vadd.f32 %v428, %v546
  %v548 = vpop.f32.mrb[0].mxu0
  %549 = vmatprep.mubr.f32.mxu0 %v364
  %550 = vmatmul.mubr.f32.gmra.mrb[0].mxu0 %v363
  %v551 = vpop.f32.mrb[0].mxu0
  %v552 = vadd.f32 %v428, %v551
  %v553 = vpop.f32.mrb[0].mxu0
  %554 = vmatprep.mubr.f32.mxu0 %v366
  %555 = vmatmul.mubr.f32.gmra.mrb[0].mxu0 %v365
  %v556 = vpop.f32.mrb[0].mxu0
  %v557 = vadd.f32 %v428, %v556
  %v558 = vpop.f32.mrb[0].mxu0
  %559 = vmatprep.mubr.f32.mxu0 %v368
  %560 = vmatmul.mubr.f32.gmra.mrb[0].mxu0 %v367
  %v561 = vpop.f32.mrb[0].mxu0
  %v562 = vadd.f32 %v428, %v561
  %v563 = vpop.f32.mrb[0].mxu0
  %564 = vmatprep.mubr.f32.mxu0 %v370
  %565 = vmatmul.mubr.f32.gmra.mrb[0].mxu0 %v369
  %v566 = vpop.f32.mrb[0].mxu0
  %v567 = vadd.f32 %v428, %v566
  %v568 = vpop.f32.mrb[0].mxu0
  %569 = vmatprep.mubr.f32.mxu0 %v372
  %570 = vmatmul.mubr.f32.gmra.mrb[0].mxu0 %v371
  %v571 = vpop.f32.mrb[0].mxu0
  %v572 = vadd.f32 %v428, %v571
  %v573 = vpop.f32.mrb[0].mxu0
  %574 = vmatprep.mubr.f32.mxu0 %v374
  %575 = vmatmul.mubr.f32.gmra.mrb[0].mxu0 %v373
  %v576 = vpop.f32.mrb[0].mxu0
  %v577 = vadd.f32 %v428, %v576
  %v578 = vpop.f32.mrb[0].mxu0
  %579 = vmatprep.mubr.f32.mxu0 %v376
  %580 = vmatmul.mubr.f32.gmra.mrb[0].mxu0 %v375
  %v581 = vpop.f32.mrb[0].mxu0
  %v582 = vadd.f32 %v428, %v581
  %v583 = vpop.f32.mrb[0].mxu0
  %584 = vmatprep.mubr.f32.mxu0 %v378
  %585 = vmatmul.mubr.f32.gmra.mrb[0].mxu0 %v377
  %v586 = vpop.f32.mrb[0].mxu0
  %v587 = vadd.f32 %v428, %v586
  %v588 = vpop.f32.mrb[0].mxu0
  %589 = vmatprep.mubr.f32.mxu0 %v380
  %590 = vmatmul.mubr.f32.gmra.mrb[0].mxu0 %v379
  %v591 = vpop.f32.mrb[0].mxu0
  %v592 = vadd.f32 %v428, %v591
  %v593 = vpop.f32.mrb[0].mxu0
  %594 = vmatprep.mubr.f32.mxu0 %v382
  %595 = vmatmul.mubr.f32.gmra.mrb[0].mxu0 %v381
  %v596 = vpop.f32.mrb[0].mxu0
  %v597 = vadd.f32 %v428, %v596
  %v598 = vpop.f32.mrb[0].mxu0
  %599 = vmatprep.mubr.f32.mxu0 %v384
  %600 = vmatmul.mubr.f32.gmra.mrb[0].mxu0 %v383
  %v601 = vpop.f32.mrb[0].mxu0
  %v602 = vadd.f32 %v428, %v601
  %v603 = vpop.f32.mrb[0].mxu0
  %604 = vmatprep.mubr.f32.mxu0 %v386
  %605 = vmatmul.mubr.f32.gmra.mrb[0].mxu0 %v385
  %v606 = vpop.f32.mrb[0].mxu0
  %v607 = vadd.f32 %v428, %v606
  %v608 = vpop.f32.mrb[0].mxu0
  %609 = vmatprep.mubr.f32.mxu0 %v388
  %610 = vmatmul.mubr.f32.gmra.mrb[0].mxu0 %v387
  %v611 = vpop.f32.mrb[0].mxu0
  %v612 = vadd.f32 %v428, %v611
  %v613 = vpop.f32.mrb[0].mxu0
  %614 = vmatprep.mubr.f32.mxu0 %v390
  %615 = vmatmul.mubr.f32.gmra.mrb[0].mxu0 %v389
  %v616 = vpop.f32.mrb[0].mxu0
  %v617 = vadd.f32 %v428, %v616
  %v618 = vpop.f32.mrb[0].mxu0
  %619 = vdwg.mxu0
  %620 = vst [vmem:[%s4] sm:$0xff] %v497
  %621 = vst [vmem:[%s4 + $0x8] sm:$0xff] %v502
  %622 = vst [vmem:[%s4 + $0x10] sm:$0xff] %v507
  %623 = vst [vmem:[%s4 + $0x18] sm:$0xff] %v512
  %624 = vst [vmem:[%s4 + $0x20] sm:$0xff] %v517
  %625 = vst [vmem:[%s4 + $0x28] sm:$0xff] %v522
  %626 = vst [vmem:[%s4 + $0x30] sm:$0xff] %v527
  %627 = vst [vmem:[%s4 + $0x38] sm:$0xff] %v532
  %628 = vst [vmem:[%s4 + $0x40] sm:$0xff] %v537
  %629 = vst [vmem:[%s4 + $0x48] sm:$0xff] %v542
  %630 = vst [vmem:[%s4 + $0x50] sm:$0xff] %v547
  %631 = vst [vmem:[%s4 + $0x58] sm:$0xff] %v552
  %632 = vst [vmem:[%s4 + $0x60] sm:$0xff] %v557
  %633 = vst [vmem:[%s4 + $0x68] sm:$0xff] %v562
  %634 = vst [vmem:[%s4 + $0x70] sm:$0xff] %v567
  %635 = vst [vmem:[%s4 + $0x78] sm:$0xff] %v572
  %636 = vst [vmem:[%s4 + $0x80] sm:$0xff] %v577
  %637 = vst [vmem:[%s4 + $0x88] sm:$0xff] %v582
  %638 = vst [vmem:[%s4 + $0x90] sm:$0xff] %v587
  %639 = vst [vmem:[%s4 + $0x98] sm:$0xff] %v592
  %640 = vst [vmem:[%s4 + $0xa0] sm:$0xff] %v597
  %641 = vst [vmem:[%s4 + $0xa8] sm:$0xff] %v602
  %642 = vst [vmem:[%s4 + $0xb0] sm:$0xff] %v607
  %643 = vst [vmem:[%s4 + $0xb8] sm:$0xff] %v612
  %644 = vst [vmem:[%s4 + $0xc0] sm:$0xff] %v617
  // Predicated region
  $region18: #{forward.1} parent=0 // pred_check
    _
  $region19: #{forward.1} parent=0 // pred_check_branch
    %646 = sbr.rel (0) target = $region21
  $region20: #{forward.1} parent=0 // pred_region
    _
  $region21: #{forward.1} parent=0 // pred_fallthru
    _
  // Predicated region
  $region22: #{forward.1} parent=0 // pred_check
    _
  $region23: #{forward.1} parent=0 // pred_check_branch
    %648 = sbr.rel (0) target = $region25
  $region24: #{forward.1} parent=0 // pred_region
    _
  $region25: #{forward.1} parent=0 // pred_fallthru
    _

</llo_original>
